<compile_context>
chip_gen: v5e
topology: v5e:2x2
jax: 0.10.0
libtpu: 0.0.40
codegen_flags: <defaults>
</compile_context>

<pallas_src>
import jax
import jax.numpy as jnp
from jax.experimental import pallas as pl
from jax.experimental.pallas import tpu as pltpu


def _round_up(x, m):
    return ((x + m - 1) // m) * m


def additive_residual_kernel(w_ref, b_ref, x_ref, o_ref):
    """Per-pixel channel mix: o[b, co] = sum_ci w[co, ci] * x[b, ci] + b[co].

    w_ref: (C, C)           SMEM folded weight  W' = a*I + (1-a)*W
    b_ref: (C,)             SMEM folded bias    b' = (1-a)*b
    x_ref: (nb, C, tB, 128) VMEM input tile  (full-vreg per-channel slabs)
    o_ref: (nb, C, tB, 128) VMEM output tile
    """
    nb, C = x_ref.shape[0], x_ref.shape[1]
    for b in range(nb):
        for co in range(C):
            acc = x_ref[b, 0].astype(jnp.float32) * w_ref[co, 0]
            for ci in range(1, C):
                acc = acc + x_ref[b, ci].astype(jnp.float32) * w_ref[co, ci]
            # Store each output channel as soon as it is ready (no concat,
            # frees vregs immediately, lets stores overlap remaining FMAs).
            o_ref[b, co] = (acc + b_ref[co]).astype(o_ref.dtype)


def _pick_tiles(N, C, S, itemsize):
    """Pick (nb, tB) so one grid step moves ~4 MB of HBM traffic (in+out)."""
    target_elems = (4 * 1024 * 1024) // (2 * itemsize)       # per direction
    max_tb = max(8, ((target_elems // (C * 128)) // 8) * 8)  # multiple of 8
    if S <= max_tb:
        tB = S                      # full spatial extent -> no partial block
    else:
        tB = max_tb                 # prefer a multiple-of-8 divisor of S
        for cand in range(max_tb, 7, -8):
            if S % cand == 0:
                tB = cand
                break
    per_img = C * tB * 128
    nb = max(1, min(N, target_elems // per_img))
    while N % nb:                   # avoid partial batch blocks
        nb -= 1
    return nb, tB


@jax.jit
def additive_residual(x_nchw, w_oi, b, alpha_param):
    """AdditiveResidual forward with fn = 1x1 Conv2d (C -> C, bias).

    x_nchw:      (N, C, H, W), any float dtype (preserved on output)
    w_oi:        (C_out, C_in) 1x1-conv weight (PyTorch layout)
    b:           (C_out,) bias
    alpha_param: raw scalar parameter (sigmoid applied here)
    """
    N, C, H, W = x_nchw.shape
    HW = H * W
    itemsize = jnp.dtype(x_nchw.dtype).itemsize

    # Fold the residual blend into the 1x1-conv parameters (exact identity).
    a = jax.nn.sigmoid(jnp.asarray(alpha_param, jnp.float32))
    beta = 1.0 - a
    w_f = beta * jnp.asarray(w_oi, jnp.float32) + a * jnp.eye(C, dtype=jnp.float32)
    b_f = beta * jnp.asarray(b, jnp.float32)

    # Free contiguous reshape: channels on a leading axis, spatial split into
    # rows of 128 lanes.  Pad spatial only if HW is not a multiple of 128.
    HW128 = _round_up(HW, 128)
    x3 = x_nchw.reshape(N, C, HW)
    if HW128 != HW:
        # TODO(synk): a fully pad-free ragged path would need masked stores.
        x3 = jnp.pad(x3, ((0, 0), (0, 0), (0, HW128 - HW)))
    S = HW128 // 128
    x4 = x3.reshape(N, C, S, 128)

    nb, tB = _pick_tiles(N, C, S, itemsize)
    grid = (N // nb, pl.cdiv(S, tB))

    out4 = pl.pallas_call(
        additive_residual_kernel,
        out_shape=jax.ShapeDtypeStruct((N, C, S, 128), x_nchw.dtype),
        grid=grid,
        in_specs=[
            pl.BlockSpec(memory_space=pltpu.MemorySpace.SMEM),          # w_f
            pl.BlockSpec(memory_space=pltpu.MemorySpace.SMEM),          # b_f
            pl.BlockSpec((nb, C, tB, 128), lambda n, s: (n, 0, s, 0)),  # x tile
        ],
        out_specs=pl.BlockSpec((nb, C, tB, 128), lambda n, s: (n, 0, s, 0)),
        compiler_params=pltpu.CompilerParams(
            dimension_semantics=("parallel", "parallel")),
    )(w_f, b_f, x4)

    out3 = out4.reshape(N, C, HW128)
    if HW128 != HW:
        out3 = out3[:, :, :HW]
    return out3.reshape(N, C, H, W)


if __name__ == "__main__":
    key = jax.random.PRNGKey(0)
    kx, kw, kb = jax.random.split(key, 3)

    N, C, H, W = 2, 4, 16, 16
    x = jax.random.normal(kx, (N, C, H, W), jnp.float32)

    # Deterministic 1x1-conv params; alpha init_val=1.0 (raw, pre-sigmoid).
    w = jax.random.normal(kw, (C, C), jnp.float32) / jnp.sqrt(C)   # (C_out, C_in)
    b = jax.random.normal(kb, (C,), jnp.float32) * 0.1
    alpha = jnp.float32(1.0)

    out = jax.block_until_ready(additive_residual(x, w, b, alpha))

    # Pure-JAX reference (matches the PyTorch module's forward).
    a_ref = jax.nn.sigmoid(alpha)
    fn_ref = jnp.einsum("nchw,oc->nohw", x, w) + b.reshape(1, C, 1, 1)
    ref = a_ref * x + (1.0 - a_ref) * fn_ref
    assert out.shape == (N, C, H, W)
    assert out.dtype == x.dtype
    assert jnp.allclose(out, ref, atol=1e-5, rtol=1e-5)

    # Ragged spatial size exercises the pad-to-128 fallback path.
    H2, W2 = 10, 13
    x2 = jax.random.normal(kx, (N, C, H2, W2), jnp.float32)
    out2 = jax.block_until_ready(additive_residual(x2, w, b, alpha))
    fn2 = jnp.einsum("nchw,oc->nohw", x2, w) + b.reshape(1, C, 1, 1)
    ref2 = a_ref * x2 + (1.0 - a_ref) * fn2
    assert jnp.allclose(out2, ref2, atol=1e-5, rtol=1e-5)

    print("KERNEL_OK")
</pallas_src>

<mosaic_0001>
module attributes {stable_mosaic.version = 11 : i64} {
  func.func @additive_residual_kernel(%arg0: i32, %arg1: i32, %arg2: memref<4x4xf32, #tpu.memory_space<smem>>, %arg3: memref<4xf32, #tpu.memory_space<smem>>, %arg4: memref<2x4x2x128xf32, #tpu.memory_space<vmem>>, %arg5: memref<2x4x2x128xf32, #tpu.memory_space<vmem>>) attributes {dimension_semantics = [#tpu.dimension_semantics<parallel>, #tpu.dimension_semantics<parallel>], iteration_bounds = array<i64: 1, 1>, scalar_prefetch = 0 : i64, scratch_operands = 0 : i64, tpu.core_type = #tpu.core_type<tc>, window_params = [{transform_indices = @transform_0, window_bounds = array<i64: 4, 4>}, {transform_indices = @transform_1, window_bounds = array<i64: 4>}, {transform_indices = @transform_2, window_bounds = array<i64: 2, 4, 2, 128>}, {transform_indices = @transform_3, window_bounds = array<i64: 2, 4, 2, 128>}]} {
    %c0 = arith.constant 0 : index
    %c0_0 = arith.constant 0 : index
    %c0_1 = arith.constant 0 : index
    %c0_2 = arith.constant 0 : index
    %0 = vector.load %arg4[%c0, %c0_0, %c0_1, %c0_2] : memref<2x4x2x128xf32, #tpu.memory_space<vmem>>, vector<1x1x2x128xf32>
    %1 = vector.shape_cast %0 : vector<1x1x2x128xf32> to vector<2x128xf32>
    %c0_3 = arith.constant 0 : index
    %c0_4 = arith.constant 0 : index
    %2 = memref.load %arg2[%c0_3, %c0_4] : memref<4x4xf32, #tpu.memory_space<smem>>
    %3 = vector.broadcast %2 : f32 to vector<2x128xf32>
    %4 = arith.mulf %1, %3 : vector<2x128xf32>
    %c0_5 = arith.constant 0 : index
    %c1 = arith.constant 1 : index
    %c0_6 = arith.constant 0 : index
    %c0_7 = arith.constant 0 : index
    %5 = vector.load %arg4[%c0_5, %c1, %c0_6, %c0_7] : memref<2x4x2x128xf32, #tpu.memory_space<vmem>>, vector<1x1x2x128xf32>
    %6 = vector.shape_cast %5 : vector<1x1x2x128xf32> to vector<2x128xf32>
    %c0_8 = arith.constant 0 : index
    %c1_9 = arith.constant 1 : index
    %7 = memref.load %arg2[%c0_8, %c1_9] : memref<4x4xf32, #tpu.memory_space<smem>>
    %8 = vector.broadcast %7 : f32 to vector<2x128xf32>
    %9 = arith.mulf %6, %8 : vector<2x128xf32>
    %10 = arith.addf %4, %9 : vector<2x128xf32>
    %c0_10 = arith.constant 0 : index
    %c2 = arith.constant 2 : index
    %c0_11 = arith.constant 0 : index
    %c0_12 = arith.constant 0 : index
    %11 = vector.load %arg4[%c0_10, %c2, %c0_11, %c0_12] : memref<2x4x2x128xf32, #tpu.memory_space<vmem>>, vector<1x1x2x128xf32>
    %12 = vector.shape_cast %11 : vector<1x1x2x128xf32> to vector<2x128xf32>
    %c0_13 = arith.constant 0 : index
    %c2_14 = arith.constant 2 : index
    %13 = memref.load %arg2[%c0_13, %c2_14] : memref<4x4xf32, #tpu.memory_space<smem>>
    %14 = vector.broadcast %13 : f32 to vector<2x128xf32>
    %15 = arith.mulf %12, %14 : vector<2x128xf32>
    %16 = arith.addf %10, %15 : vector<2x128xf32>
    %c0_15 = arith.constant 0 : index
    %c3 = arith.constant 3 : index
    %c0_16 = arith.constant 0 : index
    %c0_17 = arith.constant 0 : index
    %17 = vector.load %arg4[%c0_15, %c3, %c0_16, %c0_17] : memref<2x4x2x128xf32, #tpu.memory_space<vmem>>, vector<1x1x2x128xf32>
    %18 = vector.shape_cast %17 : vector<1x1x2x128xf32> to vector<2x128xf32>
    %c0_18 = arith.constant 0 : index
    %c3_19 = arith.constant 3 : index
    %19 = memref.load %arg2[%c0_18, %c3_19] : memref<4x4xf32, #tpu.memory_space<smem>>
    %20 = vector.broadcast %19 : f32 to vector<2x128xf32>
    %21 = arith.mulf %18, %20 : vector<2x128xf32>
    %22 = arith.addf %16, %21 : vector<2x128xf32>
    %c0_20 = arith.constant 0 : index
    %23 = memref.load %arg3[%c0_20] : memref<4xf32, #tpu.memory_space<smem>>
    %24 = vector.broadcast %23 : f32 to vector<2x128xf32>
    %25 = arith.addf %22, %24 : vector<2x128xf32>
    %c0_21 = arith.constant 0 : index
    %c0_22 = arith.constant 0 : index
    %c0_23 = arith.constant 0 : index
    %c0_24 = arith.constant 0 : index
    %26 = vector.load %arg5[%c0_21, %c0_22, %c0_23, %c0_24] : memref<2x4x2x128xf32, #tpu.memory_space<vmem>>, vector<1x1x2x128xf32>
    %27 = vector.shape_cast %26 : vector<1x1x2x128xf32> to vector<2x128xf32>
    %28 = vector.shape_cast %25 : vector<2x128xf32> to vector<1x1x2x128xf32>
    tpu.vector_store %arg5[%c0_21, %c0_22, %c0_23, %c0_24], %28 {strides = array<i32>} : memref<2x4x2x128xf32, #tpu.memory_space<vmem>>, vector<1x1x2x128xf32>,
    %c0_25 = arith.constant 0 : index
    %c0_26 = arith.constant 0 : index
    %c0_27 = arith.constant 0 : index
    %c0_28 = arith.constant 0 : index
    %29 = vector.load %arg4[%c0_25, %c0_26, %c0_27, %c0_28] : memref<2x4x2x128xf32, #tpu.memory_space<vmem>>, vector<1x1x2x128xf32>
    %30 = vector.shape_cast %29 : vector<1x1x2x128xf32> to vector<2x128xf32>
    %c1_29 = arith.constant 1 : index
    %c0_30 = arith.constant 0 : index
    %31 = memref.load %arg2[%c1_29, %c0_30] : memref<4x4xf32, #tpu.memory_space<smem>>
    %32 = vector.broadcast %31 : f32 to vector<2x128xf32>
    %33 = arith.mulf %30, %32 : vector<2x128xf32>
    %c0_31 = arith.constant 0 : index
    %c1_32 = arith.constant 1 : index
    %c0_33 = arith.constant 0 : index
    %c0_34 = arith.constant 0 : index
    %34 = vector.load %arg4[%c0_31, %c1_32, %c0_33, %c0_34] : memref<2x4x2x128xf32, #tpu.memory_space<vmem>>, vector<1x1x2x128xf32>
    %35 = vector.shape_cast %34 : vector<1x1x2x128xf32> to vector<2x128xf32>
    %c1_35 = arith.constant 1 : index
    %c1_36 = arith.constant 1 : index
    %36 = memref.load %arg2[%c1_35, %c1_36] : memref<4x4xf32, #tpu.memory_space<smem>>
    %37 = vector.broadcast %36 : f32 to vector<2x128xf32>
    %38 = arith.mulf %35, %37 : vector<2x128xf32>
    %39 = arith.addf %33, %38 : vector<2x128xf32>
    %c0_37 = arith.constant 0 : index
    %c2_38 = arith.constant 2 : index
    %c0_39 = arith.constant 0 : index
    %c0_40 = arith.constant 0 : index
    %40 = vector.load %arg4[%c0_37, %c2_38, %c0_39, %c0_40] : memref<2x4x2x128xf32, #tpu.memory_space<vmem>>, vector<1x1x2x128xf32>
    %41 = vector.shape_cast %40 : vector<1x1x2x128xf32> to vector<2x128xf32>
    %c1_41 = arith.constant 1 : index
    %c2_42 = arith.constant 2 : index
    %42 = memref.load %arg2[%c1_41, %c2_42] : memref<4x4xf32, #tpu.memory_space<smem>>
    %43 = vector.broadcast %42 : f32 to vector<2x128xf32>
    %44 = arith.mulf %41, %43 : vector<2x128xf32>
    %45 = arith.addf %39, %44 : vector<2x128xf32>
    %c0_43 = arith.constant 0 : index
    %c3_44 = arith.constant 3 : index
    %c0_45 = arith.constant 0 : index
    %c0_46 = arith.constant 0 : index
    %46 = vector.load %arg4[%c0_43, %c3_44, %c0_45, %c0_46] : memref<2x4x2x128xf32, #tpu.memory_space<vmem>>, vector<1x1x2x128xf32>
    %47 = vector.shape_cast %46 : vector<1x1x2x128xf32> to vector<2x128xf32>
    %c1_47 = arith.constant 1 : index
    %c3_48 = arith.constant 3 : index
    %48 = memref.load %arg2[%c1_47, %c3_48] : memref<4x4xf32, #tpu.memory_space<smem>>
    %49 = vector.broadcast %48 : f32 to vector<2x128xf32>
    %50 = arith.mulf %47, %49 : vector<2x128xf32>
    %51 = arith.addf %45, %50 : vector<2x128xf32>
    %c1_49 = arith.constant 1 : index
    %52 = memref.load %arg3[%c1_49] : memref<4xf32, #tpu.memory_space<smem>>
    %53 = vector.broadcast %52 : f32 to vector<2x128xf32>
    %54 = arith.addf %51, %53 : vector<2x128xf32>
    %c0_50 = arith.constant 0 : index
    %c1_51 = arith.constant 1 : index
    %c0_52 = arith.constant 0 : index
    %c0_53 = arith.constant 0 : index
    %55 = vector.load %arg5[%c0_50, %c1_51, %c0_52, %c0_53] : memref<2x4x2x128xf32, #tpu.memory_space<vmem>>, vector<1x1x2x128xf32>
    %56 = vector.shape_cast %55 : vector<1x1x2x128xf32> to vector<2x128xf32>
    %57 = vector.shape_cast %54 : vector<2x128xf32> to vector<1x1x2x128xf32>
    tpu.vector_store %arg5[%c0_50, %c1_51, %c0_52, %c0_53], %57 {strides = array<i32>} : memref<2x4x2x128xf32, #tpu.memory_space<vmem>>, vector<1x1x2x128xf32>,
    %c0_54 = arith.constant 0 : index
    %c0_55 = arith.constant 0 : index
    %c0_56 = arith.constant 0 : index
    %c0_57 = arith.constant 0 : index
    %58 = vector.load %arg4[%c0_54, %c0_55, %c0_56, %c0_57] : memref<2x4x2x128xf32, #tpu.memory_space<vmem>>, vector<1x1x2x128xf32>
    %59 = vector.shape_cast %58 : vector<1x1x2x128xf32> to vector<2x128xf32>
    %c2_58 = arith.constant 2 : index
    %c0_59 = arith.constant 0 : index
    %60 = memref.load %arg2[%c2_58, %c0_59] : memref<4x4xf32, #tpu.memory_space<smem>>
    %61 = vector.broadcast %60 : f32 to vector<2x128xf32>
    %62 = arith.mulf %59, %61 : vector<2x128xf32>
    %c0_60 = arith.constant 0 : index
    %c1_61 = arith.constant 1 : index
    %c0_62 = arith.constant 0 : index
    %c0_63 = arith.constant 0 : index
    %63 = vector.load %arg4[%c0_60, %c1_61, %c0_62, %c0_63] : memref<2x4x2x128xf32, #tpu.memory_space<vmem>>, vector<1x1x2x128xf32>
    %64 = vector.shape_cast %63 : vector<1x1x2x128xf32> to vector<2x128xf32>
    %c2_64 = arith.constant 2 : index
    %c1_65 = arith.constant 1 : index
    %65 = memref.load %arg2[%c2_64, %c1_65] : memref<4x4xf32, #tpu.memory_space<smem>>
    %66 = vector.broadcast %65 : f32 to vector<2x128xf32>
    %67 = arith.mulf %64, %66 : vector<2x128xf32>
    %68 = arith.addf %62, %67 : vector<2x128xf32>
    %c0_66 = arith.constant 0 : index
    %c2_67 = arith.constant 2 : index
    %c0_68 = arith.constant 0 : index
    %c0_69 = arith.constant 0 : index
    %69 = vector.load %arg4[%c0_66, %c2_67, %c0_68, %c0_69] : memref<2x4x2x128xf32, #tpu.memory_space<vmem>>, vector<1x1x2x128xf32>
    %70 = vector.shape_cast %69 : vector<1x1x2x128xf32> to vector<2x128xf32>
    %c2_70 = arith.constant 2 : index
    %c2_71 = arith.constant 2 : index
    %71 = memref.load %arg2[%c2_70, %c2_71] : memref<4x4xf32, #tpu.memory_space<smem>>
    %72 = vector.broadcast %71 : f32 to vector<2x128xf32>
    %73 = arith.mulf %70, %72 : vector<2x128xf32>
    %74 = arith.addf %68, %73 : vector<2x128xf32>
    %c0_72 = arith.constant 0 : index
    %c3_73 = arith.constant 3 : index
    %c0_74 = arith.constant 0 : index
    %c0_75 = arith.constant 0 : index
    %75 = vector.load %arg4[%c0_72, %c3_73, %c0_74, %c0_75] : memref<2x4x2x128xf32, #tpu.memory_space<vmem>>, vector<1x1x2x128xf32>
    %76 = vector.shape_cast %75 : vector<1x1x2x128xf32> to vector<2x128xf32>
    %c2_76 = arith.constant 2 : index
    %c3_77 = arith.constant 3 : index
    %77 = memref.load %arg2[%c2_76, %c3_77] : memref<4x4xf32, #tpu.memory_space<smem>>
    %78 = vector.broadcast %77 : f32 to vector<2x128xf32>
    %79 = arith.mulf %76, %78 : vector<2x128xf32>
    %80 = arith.addf %74, %79 : vector<2x128xf32>
    %c2_78 = arith.constant 2 : index
    %81 = memref.load %arg3[%c2_78] : memref<4xf32, #tpu.memory_space<smem>>
    %82 = vector.broadcast %81 : f32 to vector<2x128xf32>
    %83 = arith.addf %80, %82 : vector<2x128xf32>
    %c0_79 = arith.constant 0 : index
    %c2_80 = arith.constant 2 : index
    %c0_81 = arith.constant 0 : index
    %c0_82 = arith.constant 0 : index
    %84 = vector.load %arg5[%c0_79, %c2_80, %c0_81, %c0_82] : memref<2x4x2x128xf32, #tpu.memory_space<vmem>>, vector<1x1x2x128xf32>
    %85 = vector.shape_cast %84 : vector<1x1x2x128xf32> to vector<2x128xf32>
    %86 = vector.shape_cast %83 : vector<2x128xf32> to vector<1x1x2x128xf32>
    tpu.vector_store %arg5[%c0_79, %c2_80, %c0_81, %c0_82], %86 {strides = array<i32>} : memref<2x4x2x128xf32, #tpu.memory_space<vmem>>, vector<1x1x2x128xf32>,
    %c0_83 = arith.constant 0 : index
    %c0_84 = arith.constant 0 : index
    %c0_85 = arith.constant 0 : index
    %c0_86 = arith.constant 0 : index
    %87 = vector.load %arg4[%c0_83, %c0_84, %c0_85, %c0_86] : memref<2x4x2x128xf32, #tpu.memory_space<vmem>>, vector<1x1x2x128xf32>
    %88 = vector.shape_cast %87 : vector<1x1x2x128xf32> to vector<2x128xf32>
    %c3_87 = arith.constant 3 : index
    %c0_88 = arith.constant 0 : index
    %89 = memref.load %arg2[%c3_87, %c0_88] : memref<4x4xf32, #tpu.memory_space<smem>>
    %90 = vector.broadcast %89 : f32 to vector<2x128xf32>
    %91 = arith.mulf %88, %90 : vector<2x128xf32>
    %c0_89 = arith.constant 0 : index
    %c1_90 = arith.constant 1 : index
    %c0_91 = arith.constant 0 : index
    %c0_92 = arith.constant 0 : index
    %92 = vector.load %arg4[%c0_89, %c1_90, %c0_91, %c0_92] : memref<2x4x2x128xf32, #tpu.memory_space<vmem>>, vector<1x1x2x128xf32>
    %93 = vector.shape_cast %92 : vector<1x1x2x128xf32> to vector<2x128xf32>
    %c3_93 = arith.constant 3 : index
    %c1_94 = arith.constant 1 : index
    %94 = memref.load %arg2[%c3_93, %c1_94] : memref<4x4xf32, #tpu.memory_space<smem>>
    %95 = vector.broadcast %94 : f32 to vector<2x128xf32>
    %96 = arith.mulf %93, %95 : vector<2x128xf32>
    %97 = arith.addf %91, %96 : vector<2x128xf32>
    %c0_95 = arith.constant 0 : index
    %c2_96 = arith.constant 2 : index
    %c0_97 = arith.constant 0 : index
    %c0_98 = arith.constant 0 : index
    %98 = vector.load %arg4[%c0_95, %c2_96, %c0_97, %c0_98] : memref<2x4x2x128xf32, #tpu.memory_space<vmem>>, vector<1x1x2x128xf32>
    %99 = vector.shape_cast %98 : vector<1x1x2x128xf32> to vector<2x128xf32>
    %c3_99 = arith.constant 3 : index
    %c2_100 = arith.constant 2 : index
    %100 = memref.load %arg2[%c3_99, %c2_100] : memref<4x4xf32, #tpu.memory_space<smem>>
    %101 = vector.broadcast %100 : f32 to vector<2x128xf32>
    %102 = arith.mulf %99, %101 : vector<2x128xf32>
    %103 = arith.addf %97, %102 : vector<2x128xf32>
    %c0_101 = arith.constant 0 : index
    %c3_102 = arith.constant 3 : index
    %c0_103 = arith.constant 0 : index
    %c0_104 = arith.constant 0 : index
    %104 = vector.load %arg4[%c0_101, %c3_102, %c0_103, %c0_104] : memref<2x4x2x128xf32, #tpu.memory_space<vmem>>, vector<1x1x2x128xf32>
    %105 = vector.shape_cast %104 : vector<1x1x2x128xf32> to vector<2x128xf32>
    %c3_105 = arith.constant 3 : index
    %c3_106 = arith.constant 3 : index
    %106 = memref.load %arg2[%c3_105, %c3_106] : memref<4x4xf32, #tpu.memory_space<smem>>
    %107 = vector.broadcast %106 : f32 to vector<2x128xf32>
    %108 = arith.mulf %105, %107 : vector<2x128xf32>
    %109 = arith.addf %103, %108 : vector<2x128xf32>
    %c3_107 = arith.constant 3 : index
    %110 = memref.load %arg3[%c3_107] : memref<4xf32, #tpu.memory_space<smem>>
    %111 = vector.broadcast %110 : f32 to vector<2x128xf32>
    %112 = arith.addf %109, %111 : vector<2x128xf32>
    %c0_108 = arith.constant 0 : index
    %c3_109 = arith.constant 3 : index
    %c0_110 = arith.constant 0 : index
    %c0_111 = arith.constant 0 : index
    %113 = vector.load %arg5[%c0_108, %c3_109, %c0_110, %c0_111] : memref<2x4x2x128xf32, #tpu.memory_space<vmem>>, vector<1x1x2x128xf32>
    %114 = vector.shape_cast %113 : vector<1x1x2x128xf32> to vector<2x128xf32>
    %115 = vector.shape_cast %112 : vector<2x128xf32> to vector<1x1x2x128xf32>
    tpu.vector_store %arg5[%c0_108, %c3_109, %c0_110, %c0_111], %115 {strides = array<i32>} : memref<2x4x2x128xf32, #tpu.memory_space<vmem>>, vector<1x1x2x128xf32>,
    %c1_112 = arith.constant 1 : index
    %c0_113 = arith.constant 0 : index
    %c0_114 = arith.constant 0 : index
    %c0_115 = arith.constant 0 : index
    %116 = vector.load %arg4[%c1_112, %c0_113, %c0_114, %c0_115] : memref<2x4x2x128xf32, #tpu.memory_space<vmem>>, vector<1x1x2x128xf32>
    %117 = vector.shape_cast %116 : vector<1x1x2x128xf32> to vector<2x128xf32>
    %c0_116 = arith.constant 0 : index
    %c0_117 = arith.constant 0 : index
    %118 = memref.load %arg2[%c0_116, %c0_117] : memref<4x4xf32, #tpu.memory_space<smem>>
    %119 = vector.broadcast %118 : f32 to vector<2x128xf32>
    %120 = arith.mulf %117, %119 : vector<2x128xf32>
    %c1_118 = arith.constant 1 : index
    %c1_119 = arith.constant 1 : index
    %c0_120 = arith.constant 0 : index
    %c0_121 = arith.constant 0 : index
    %121 = vector.load %arg4[%c1_118, %c1_119, %c0_120, %c0_121] : memref<2x4x2x128xf32, #tpu.memory_space<vmem>>, vector<1x1x2x128xf32>
    %122 = vector.shape_cast %121 : vector<1x1x2x128xf32> to vector<2x128xf32>
    %c0_122 = arith.constant 0 : index
    %c1_123 = arith.constant 1 : index
    %123 = memref.load %arg2[%c0_122, %c1_123] : memref<4x4xf32, #tpu.memory_space<smem>>
    %124 = vector.broadcast %123 : f32 to vector<2x128xf32>
    %125 = arith.mulf %122, %124 : vector<2x128xf32>
    %126 = arith.addf %120, %125 : vector<2x128xf32>
    %c1_124 = arith.constant 1 : index
    %c2_125 = arith.constant 2 : index
    %c0_126 = arith.constant 0 : index
    %c0_127 = arith.constant 0 : index
    %127 = vector.load %arg4[%c1_124, %c2_125, %c0_126, %c0_127] : memref<2x4x2x128xf32, #tpu.memory_space<vmem>>, vector<1x1x2x128xf32>
    %128 = vector.shape_cast %127 : vector<1x1x2x128xf32> to vector<2x128xf32>
    %c0_128 = arith.constant 0 : index
    %c2_129 = arith.constant 2 : index
    %129 = memref.load %arg2[%c0_128, %c2_129] : memref<4x4xf32, #tpu.memory_space<smem>>
    %130 = vector.broadcast %129 : f32 to vector<2x128xf32>
    %131 = arith.mulf %128, %130 : vector<2x128xf32>
    %132 = arith.addf %126, %131 : vector<2x128xf32>
    %c1_130 = arith.constant 1 : index
    %c3_131 = arith.constant 3 : index
    %c0_132 = arith.constant 0 : index
    %c0_133 = arith.constant 0 : index
    %133 = vector.load %arg4[%c1_130, %c3_131, %c0_132, %c0_133] : memref<2x4x2x128xf32, #tpu.memory_space<vmem>>, vector<1x1x2x128xf32>
    %134 = vector.shape_cast %133 : vector<1x1x2x128xf32> to vector<2x128xf32>
    %c0_134 = arith.constant 0 : index
    %c3_135 = arith.constant 3 : index
    %135 = memref.load %arg2[%c0_134, %c3_135] : memref<4x4xf32, #tpu.memory_space<smem>>
    %136 = vector.broadcast %135 : f32 to vector<2x128xf32>
    %137 = arith.mulf %134, %136 : vector<2x128xf32>
    %138 = arith.addf %132, %137 : vector<2x128xf32>
    %c0_136 = arith.constant 0 : index
    %139 = memref.load %arg3[%c0_136] : memref<4xf32, #tpu.memory_space<smem>>
    %140 = vector.broadcast %139 : f32 to vector<2x128xf32>
    %141 = arith.addf %138, %140 : vector<2x128xf32>
    %c1_137 = arith.constant 1 : index
    %c0_138 = arith.constant 0 : index
    %c0_139 = arith.constant 0 : index
    %c0_140 = arith.constant 0 : index
    %142 = vector.load %arg5[%c1_137, %c0_138, %c0_139, %c0_140] : memref<2x4x2x128xf32, #tpu.memory_space<vmem>>, vector<1x1x2x128xf32>
    %143 = vector.shape_cast %142 : vector<1x1x2x128xf32> to vector<2x128xf32>
    %144 = vector.shape_cast %141 : vector<2x128xf32> to vector<1x1x2x128xf32>
    tpu.vector_store %arg5[%c1_137, %c0_138, %c0_139, %c0_140], %144 {strides = array<i32>} : memref<2x4x2x128xf32, #tpu.memory_space<vmem>>, vector<1x1x2x128xf32>,
    %c1_141 = arith.constant 1 : index
    %c0_142 = arith.constant 0 : index
    %c0_143 = arith.constant 0 : index
    %c0_144 = arith.constant 0 : index
    %145 = vector.load %arg4[%c1_141, %c0_142, %c0_143, %c0_144] : memref<2x4x2x128xf32, #tpu.memory_space<vmem>>, vector<1x1x2x128xf32>
    %146 = vector.shape_cast %145 : vector<1x1x2x128xf32> to vector<2x128xf32>
    %c1_145 = arith.constant 1 : index
    %c0_146 = arith.constant 0 : index
    %147 = memref.load %arg2[%c1_145, %c0_146] : memref<4x4xf32, #tpu.memory_space<smem>>
    %148 = vector.broadcast %147 : f32 to vector<2x128xf32>
    %149 = arith.mulf %146, %148 : vector<2x128xf32>
    %c1_147 = arith.constant 1 : index
    %c1_148 = arith.constant 1 : index
    %c0_149 = arith.constant 0 : index
    %c0_150 = arith.constant 0 : index
    %150 = vector.load %arg4[%c1_147, %c1_148, %c0_149, %c0_150] : memref<2x4x2x128xf32, #tpu.memory_space<vmem>>, vector<1x1x2x128xf32>
    %151 = vector.shape_cast %150 : vector<1x1x2x128xf32> to vector<2x128xf32>
    %c1_151 = arith.constant 1 : index
    %c1_152 = arith.constant 1 : index
    %152 = memref.load %arg2[%c1_151, %c1_152] : memref<4x4xf32, #tpu.memory_space<smem>>
    %153 = vector.broadcast %152 : f32 to vector<2x128xf32>
    %154 = arith.mulf %151, %153 : vector<2x128xf32>
    %155 = arith.addf %149, %154 : vector<2x128xf32>
    %c1_153 = arith.constant 1 : index
    %c2_154 = arith.constant 2 : index
    %c0_155 = arith.constant 0 : index
    %c0_156 = arith.constant 0 : index
    %156 = vector.load %arg4[%c1_153, %c2_154, %c0_155, %c0_156] : memref<2x4x2x128xf32, #tpu.memory_space<vmem>>, vector<1x1x2x128xf32>
    %157 = vector.shape_cast %156 : vector<1x1x2x128xf32> to vector<2x128xf32>
    %c1_157 = arith.constant 1 : index
    %c2_158 = arith.constant 2 : index
    %158 = memref.load %arg2[%c1_157, %c2_158] : memref<4x4xf32, #tpu.memory_space<smem>>
    %159 = vector.broadcast %158 : f32 to vector<2x128xf32>
    %160 = arith.mulf %157, %159 : vector<2x128xf32>
    %161 = arith.addf %155, %160 : vector<2x128xf32>
    %c1_159 = arith.constant 1 : index
    %c3_160 = arith.constant 3 : index
    %c0_161 = arith.constant 0 : index
    %c0_162 = arith.constant 0 : index
    %162 = vector.load %arg4[%c1_159, %c3_160, %c0_161, %c0_162] : memref<2x4x2x128xf32, #tpu.memory_space<vmem>>, vector<1x1x2x128xf32>
    %163 = vector.shape_cast %162 : vector<1x1x2x128xf32> to vector<2x128xf32>
    %c1_163 = arith.constant 1 : index
    %c3_164 = arith.constant 3 : index
    %164 = memref.load %arg2[%c1_163, %c3_164] : memref<4x4xf32, #tpu.memory_space<smem>>
    %165 = vector.broadcast %164 : f32 to vector<2x128xf32>
    %166 = arith.mulf %163, %165 : vector<2x128xf32>
    %167 = arith.addf %161, %166 : vector<2x128xf32>
    %c1_165 = arith.constant 1 : index
    %168 = memref.load %arg3[%c1_165] : memref<4xf32, #tpu.memory_space<smem>>
    %169 = vector.broadcast %168 : f32 to vector<2x128xf32>
    %170 = arith.addf %167, %169 : vector<2x128xf32>
    %c1_166 = arith.constant 1 : index
    %c1_167 = arith.constant 1 : index
    %c0_168 = arith.constant 0 : index
    %c0_169 = arith.constant 0 : index
    %171 = vector.load %arg5[%c1_166, %c1_167, %c0_168, %c0_169] : memref<2x4x2x128xf32, #tpu.memory_space<vmem>>, vector<1x1x2x128xf32>
    %172 = vector.shape_cast %171 : vector<1x1x2x128xf32> to vector<2x128xf32>
    %173 = vector.shape_cast %170 : vector<2x128xf32> to vector<1x1x2x128xf32>
    tpu.vector_store %arg5[%c1_166, %c1_167, %c0_168, %c0_169], %173 {strides = array<i32>} : memref<2x4x2x128xf32, #tpu.memory_space<vmem>>, vector<1x1x2x128xf32>,
    %c1_170 = arith.constant 1 : index
    %c0_171 = arith.constant 0 : index
    %c0_172 = arith.constant 0 : index
    %c0_173 = arith.constant 0 : index
    %174 = vector.load %arg4[%c1_170, %c0_171, %c0_172, %c0_173] : memref<2x4x2x128xf32, #tpu.memory_space<vmem>>, vector<1x1x2x128xf32>
    %175 = vector.shape_cast %174 : vector<1x1x2x128xf32> to vector<2x128xf32>
    %c2_174 = arith.constant 2 : index
    %c0_175 = arith.constant 0 : index
    %176 = memref.load %arg2[%c2_174, %c0_175] : memref<4x4xf32, #tpu.memory_space<smem>>
    %177 = vector.broadcast %176 : f32 to vector<2x128xf32>
    %178 = arith.mulf %175, %177 : vector<2x128xf32>
    %c1_176 = arith.constant 1 : index
    %c1_177 = arith.constant 1 : index
    %c0_178 = arith.constant 0 : index
    %c0_179 = arith.constant 0 : index
    %179 = vector.load %arg4[%c1_176, %c1_177, %c0_178, %c0_179] : memref<2x4x2x128xf32, #tpu.memory_space<vmem>>, vector<1x1x2x128xf32>
    %180 = vector.shape_cast %179 : vector<1x1x2x128xf32> to vector<2x128xf32>
    %c2_180 = arith.constant 2 : index
    %c1_181 = arith.constant 1 : index
    %181 = memref.load %arg2[%c2_180, %c1_181] : memref<4x4xf32, #tpu.memory_space<smem>>
    %182 = vector.broadcast %181 : f32 to vector<2x128xf32>
    %183 = arith.mulf %180, %182 : vector<2x128xf32>
    %184 = arith.addf %178, %183 : vector<2x128xf32>
    %c1_182 = arith.constant 1 : index
    %c2_183 = arith.constant 2 : index
    %c0_184 = arith.constant 0 : index
    %c0_185 = arith.constant 0 : index
    %185 = vector.load %arg4[%c1_182, %c2_183, %c0_184, %c0_185] : memref<2x4x2x128xf32, #tpu.memory_space<vmem>>, vector<1x1x2x128xf32>
    %186 = vector.shape_cast %185 : vector<1x1x2x128xf32> to vector<2x128xf32>
    %c2_186 = arith.constant 2 : index
    %c2_187 = arith.constant 2 : index
    %187 = memref.load %arg2[%c2_186, %c2_187] : memref<4x4xf32, #tpu.memory_space<smem>>
    %188 = vector.broadcast %187 : f32 to vector<2x128xf32>
    %189 = arith.mulf %186, %188 : vector<2x128xf32>
    %190 = arith.addf %184, %189 : vector<2x128xf32>
    %c1_188 = arith.constant 1 : index
    %c3_189 = arith.constant 3 : index
    %c0_190 = arith.constant 0 : index
    %c0_191 = arith.constant 0 : index
    %191 = vector.load %arg4[%c1_188, %c3_189, %c0_190, %c0_191] : memref<2x4x2x128xf32, #tpu.memory_space<vmem>>, vector<1x1x2x128xf32>
    %192 = vector.shape_cast %191 : vector<1x1x2x128xf32> to vector<2x128xf32>
    %c2_192 = arith.constant 2 : index
    %c3_193 = arith.constant 3 : index
    %193 = memref.load %arg2[%c2_192, %c3_193] : memref<4x4xf32, #tpu.memory_space<smem>>
    %194 = vector.broadcast %193 : f32 to vector<2x128xf32>
    %195 = arith.mulf %192, %194 : vector<2x128xf32>
    %196 = arith.addf %190, %195 : vector<2x128xf32>
    %c2_194 = arith.constant 2 : index
    %197 = memref.load %arg3[%c2_194] : memref<4xf32, #tpu.memory_space<smem>>
    %198 = vector.broadcast %197 : f32 to vector<2x128xf32>
    %199 = arith.addf %196, %198 : vector<2x128xf32>
    %c1_195 = arith.constant 1 : index
    %c2_196 = arith.constant 2 : index
    %c0_197 = arith.constant 0 : index
    %c0_198 = arith.constant 0 : index
    %200 = vector.load %arg5[%c1_195, %c2_196, %c0_197, %c0_198] : memref<2x4x2x128xf32, #tpu.memory_space<vmem>>, vector<1x1x2x128xf32>
    %201 = vector.shape_cast %200 : vector<1x1x2x128xf32> to vector<2x128xf32>
    %202 = vector.shape_cast %199 : vector<2x128xf32> to vector<1x1x2x128xf32>
    tpu.vector_store %arg5[%c1_195, %c2_196, %c0_197, %c0_198], %202 {strides = array<i32>} : memref<2x4x2x128xf32, #tpu.memory_space<vmem>>, vector<1x1x2x128xf32>,
    %c1_199 = arith.constant 1 : index
    %c0_200 = arith.constant 0 : index
    %c0_201 = arith.constant 0 : index
    %c0_202 = arith.constant 0 : index
    %203 = vector.load %arg4[%c1_199, %c0_200, %c0_201, %c0_202] : memref<2x4x2x128xf32, #tpu.memory_space<vmem>>, vector<1x1x2x128xf32>
    %204 = vector.shape_cast %203 : vector<1x1x2x128xf32> to vector<2x128xf32>
    %c3_203 = arith.constant 3 : index
    %c0_204 = arith.constant 0 : index
    %205 = memref.load %arg2[%c3_203, %c0_204] : memref<4x4xf32, #tpu.memory_space<smem>>
    %206 = vector.broadcast %205 : f32 to vector<2x128xf32>
    %207 = arith.mulf %204, %206 : vector<2x128xf32>
    %c1_205 = arith.constant 1 : index
    %c1_206 = arith.constant 1 : index
    %c0_207 = arith.constant 0 : index
    %c0_208 = arith.constant 0 : index
    %208 = vector.load %arg4[%c1_205, %c1_206, %c0_207, %c0_208] : memref<2x4x2x128xf32, #tpu.memory_space<vmem>>, vector<1x1x2x128xf32>
    %209 = vector.shape_cast %208 : vector<1x1x2x128xf32> to vector<2x128xf32>
    %c3_209 = arith.constant 3 : index
    %c1_210 = arith.constant 1 : index
    %210 = memref.load %arg2[%c3_209, %c1_210] : memref<4x4xf32, #tpu.memory_space<smem>>
    %211 = vector.broadcast %210 : f32 to vector<2x128xf32>
    %212 = arith.mulf %209, %211 : vector<2x128xf32>
    %213 = arith.addf %207, %212 : vector<2x128xf32>
    %c1_211 = arith.constant 1 : index
    %c2_212 = arith.constant 2 : index
    %c0_213 = arith.constant 0 : index
    %c0_214 = arith.constant 0 : index
    %214 = vector.load %arg4[%c1_211, %c2_212, %c0_213, %c0_214] : memref<2x4x2x128xf32, #tpu.memory_space<vmem>>, vector<1x1x2x128xf32>
    %215 = vector.shape_cast %214 : vector<1x1x2x128xf32> to vector<2x128xf32>
    %c3_215 = arith.constant 3 : index
    %c2_216 = arith.constant 2 : index
    %216 = memref.load %arg2[%c3_215, %c2_216] : memref<4x4xf32, #tpu.memory_space<smem>>
    %217 = vector.broadcast %216 : f32 to vector<2x128xf32>
    %218 = arith.mulf %215, %217 : vector<2x128xf32>
    %219 = arith.addf %213, %218 : vector<2x128xf32>
    %c1_217 = arith.constant 1 : index
    %c3_218 = arith.constant 3 : index
    %c0_219 = arith.constant 0 : index
    %c0_220 = arith.constant 0 : index
    %220 = vector.load %arg4[%c1_217, %c3_218, %c0_219, %c0_220] : memref<2x4x2x128xf32, #tpu.memory_space<vmem>>, vector<1x1x2x128xf32>
    %221 = vector.shape_cast %220 : vector<1x1x2x128xf32> to vector<2x128xf32>
    %c3_221 = arith.constant 3 : index
    %c3_222 = arith.constant 3 : index
    %222 = memref.load %arg2[%c3_221, %c3_222] : memref<4x4xf32, #tpu.memory_space<smem>>
    %223 = vector.broadcast %222 : f32 to vector<2x128xf32>
    %224 = arith.mulf %221, %223 : vector<2x128xf32>
    %225 = arith.addf %219, %224 : vector<2x128xf32>
    %c3_223 = arith.constant 3 : index
    %226 = memref.load %arg3[%c3_223] : memref<4xf32, #tpu.memory_space<smem>>
    %227 = vector.broadcast %226 : f32 to vector<2x128xf32>
    %228 = arith.addf %225, %227 : vector<2x128xf32>
    %c1_224 = arith.constant 1 : index
    %c3_225 = arith.constant 3 : index
    %c0_226 = arith.constant 0 : index
    %c0_227 = arith.constant 0 : index
    %229 = vector.load %arg5[%c1_224, %c3_225, %c0_226, %c0_227] : memref<2x4x2x128xf32, #tpu.memory_space<vmem>>, vector<1x1x2x128xf32>
    %230 = vector.shape_cast %229 : vector<1x1x2x128xf32> to vector<2x128xf32>
    %231 = vector.shape_cast %228 : vector<2x128xf32> to vector<1x1x2x128xf32>
    tpu.vector_store %arg5[%c1_224, %c3_225, %c0_226, %c0_227], %231 {strides = array<i32>} : memref<2x4x2x128xf32, #tpu.memory_space<vmem>>, vector<1x1x2x128xf32>,
    return
  }
  func.func @transform_0(%arg0: i32, %arg1: i32) -> (i32, i32) {
    %c0_i32 = arith.constant 0 : i32
    %c0_i32_0 = arith.constant 0 : i32
    %c0_i32_1 = arith.constant 0 : i32
    return %c0_i32, %c0_i32_0 : i32, i32
  }
  func.func @transform_1(%arg0: i32, %arg1: i32) -> i32 {
    %c0_i32 = arith.constant 0 : i32
    %c0_i32_0 = arith.constant 0 : i32
    return %c0_i32 : i32
  }
  func.func @transform_2(%arg0: i32, %arg1: i32) -> (i32, i32, i32, i32) {
    %c0_i32 = arith.constant 0 : i32
    %c0_i32_0 = arith.constant 0 : i32
    %c0_i32_1 = arith.constant 0 : i32
    return %arg0, %c0_i32, %arg1, %c0_i32_0 : i32, i32, i32, i32
  }
  func.func @transform_3(%arg0: i32, %arg1: i32) -> (i32, i32, i32, i32) {
    %c0_i32 = arith.constant 0 : i32
    %c0_i32_0 = arith.constant 0 : i32
    %c0_i32_1 = arith.constant 0 : i32
    return %arg0, %c0_i32, %arg1, %c0_i32_0 : i32, i32, i32, i32
  }
}

</mosaic_0001>

<llo_original>
// kernel: additive_residual.1
$region0: #{additive_residual.1}
  #allocation0 [shape = 'u32[]', space=smem, size = 0x4, offset = 0x4, fixed_abs, tag = 'smem constant byte address 0x4 - core index']
  #allocation1 [shape = 'u32[72,128]{1,0:T(1,128)}', space=vmem, size = 0x9000, scoped, tag = 'internal scratch']
  %s0 = inlined_call_operand.vmem [shape: f32[4,4], index: 0, kind: input, shape index: {}]
  %s1 = inlined_call_operand.vmem [shape: f32[4], index: 1, kind: input, shape index: {}]
  %s2 = inlined_call_operand.vmem [shape: f32[2,4,2,128], index: 2, kind: input, shape index: {}]
  %s3 = inlined_call_operand.vmem [shape: f32[2,4,2,128], index: 3, kind: output, shape index: {}]
  %s4 = sld [smem:[#allocation0]]
  $region30: #{additive_residual.1} parent=0
    _
  %s6 = ssub.s32 1, %s4
  %s7 = scalar_select 0, %s6, %s4
  $region1: #{additive_residual.1} parent=0
    #allocation2 [shape = 'u8[2048]{0}', space=smem, size = 0x800, scoped, tag = 'input window, operand 0, single buffered']
    #allocation3 [shape = 's32[1]{0}', space=sflag, size = 0x4, scoped, tag = 'scoped memory for additive_residual.1']
    #allocation4 [shape = 'u8[512]{0}', space=smem, size = 0x200, scoped, tag = 'input window, operand 1, single buffered']
    #allocation5 [shape = 's32[1]{0}', space=sflag, size = 0x4, scoped, tag = 'scoped memory for additive_residual.1']
    %8 = vsyncpa [#allocation3], 0
    %9 = vsyncpa [#allocation5], 0
    // Predicated region
    $region2: #{additive_residual.1} parent=1 // pred_check
      _
    $region3: #{additive_residual.1} parent=1 // pred_check_branch
      %11 = sbr.rel (0) target = $region5
    $region4: #{additive_residual.1} parent=1 // pred_region
      %13 = vsyncadd [#allocation3], 0
      %s15 = sshll.u32 %s0, 4
      %s16 = int_to_ptr.vmem [resolvable:$true] %s15
      %18 = dma.vmem_to_smem %s16, 64, [#allocation2], [#allocation3]
    $region5: #{additive_residual.1} parent=1 // pred_fallthru
      _
    // Predicated region
    $region6: #{additive_residual.1} parent=1 // pred_check
      _
    $region7: #{additive_residual.1} parent=1 // pred_check_branch
      %20 = sbr.rel (0) target = $region9
    $region8: #{additive_residual.1} parent=1 // pred_region
      %22 = vsyncadd [#allocation5], 0
      %s24 = sshll.u32 %s1, 4
      %s25 = int_to_ptr.vmem [resolvable:$true] %s24
      %27 = dma.vmem_to_smem %s25, 16, [#allocation4], [#allocation5]
    $region9: #{additive_residual.1} parent=1 // pred_fallthru
      _
    // Predicated region
    $region10: #{additive_residual.1} parent=1 // pred_check
      _
    $region11: #{additive_residual.1} parent=1 // pred_check_branch
      %29 = sbr.rel (0) target = $region13
    $region12: #{additive_residual.1} parent=1 // pred_region
      _
    $region13: #{additive_residual.1} parent=1 // pred_fallthru
      _
    // Predicated region
    $region14: #{additive_residual.1} parent=1 // pred_check
      _
    $region15: #{additive_residual.1} parent=1 // pred_check_branch
      %31 = sbr.rel (0) target = $region17
    $region16: #{additive_residual.1} parent=1 // pred_region
      %33 = dma.done [#allocation3], 64
    $region17: #{additive_residual.1} parent=1 // pred_fallthru
      _
    // Predicated region
    $region18: #{additive_residual.1} parent=1 // pred_check
      _
    $region19: #{additive_residual.1} parent=1 // pred_check_branch
      %35 = sbr.rel (0) target = $region21
    $region20: #{additive_residual.1} parent=1 // pred_region
      %37 = dma.done [#allocation5], 16
    $region21: #{additive_residual.1} parent=1 // pred_fallthru
      _
    %38 = sfence
    %v39 = vld [vmem:[%s2] sm:$0x3]
    %s40 = sld [smem:[#allocation2]]
    %v41 = vstv %s40
    %v42 = vmul.f32 %v39, %v41
    %s43 = scalar_lea.vmem %s2, 2
    %v44 = vld [vmem:[%s43] sm:$0x3]
    %s45 = sld [smem:[#allocation2 + $0x1]]
    %v46 = vstv %s45
    %v47 = vmul.f32 %v44, %v46
    %v48 = vadd.f32 %v42, %v47
    %s49 = scalar_lea.vmem %s2, 4
    %v50 = vld [vmem:[%s49] sm:$0x3]
    %s51 = sld [smem:[#allocation2 + $0x2]]
    %v52 = vstv %s51
    %v53 = vmul.f32 %v50, %v52
    %v54 = vadd.f32 %v48, %v53
    %s55 = scalar_lea.vmem %s2, 6
    %v56 = vld [vmem:[%s55] sm:$0x3]
    %s57 = sld [smem:[#allocation2 + $0x3]]
    %v58 = vstv %s57
    %v59 = vmul.f32 %v56, %v58
    %v60 = vadd.f32 %v54, %v59
    %s61 = sld [smem:[#allocation4]]
    %v62 = vstv %s61
    %v63 = vadd.f32 %v60, %v62
    %64 = vst [vmem:[%s3] sm:$0x3] %v63
    %v65 = vld [vmem:[%s2] sm:$0x3]
    %s66 = sld [smem:[#allocation2 + $0x80]]
    %v67 = vstv %s66
    %v68 = vmul.f32 %v65, %v67
    %v69 = vld [vmem:[%s43] sm:$0x3]
    %s70 = sld [smem:[#allocation2 + $0x81]]
    %v71 = vstv %s70
    %v72 = vmul.f32 %v69, %v71
    %v73 = vadd.f32 %v68, %v72
    %v74 = vld [vmem:[%s49] sm:$0x3]
    %s75 = sld [smem:[#allocation2 + $0x82]]
    %v76 = vstv %s75
    %v77 = vmul.f32 %v74, %v76
    %v78 = vadd.f32 %v73, %v77
    %v79 = vld [vmem:[%s55] sm:$0x3]
    %s80 = sld [smem:[#allocation2 + $0x83]]
    %v81 = vstv %s80
    %v82 = vmul.f32 %v79, %v81
    %v83 = vadd.f32 %v78, %v82
    %s84 = sld [smem:[#allocation4 + $0x1]]
    %v85 = vstv %s84
    %v86 = vadd.f32 %v83, %v85
    %s87 = scalar_lea.vmem %s3, 2
    %88 = vst [vmem:[%s87] sm:$0x3] %v86
    %v89 = vld [vmem:[%s2] sm:$0x3]
    %s90 = sld [smem:[#allocation2 + $0x100]]
    %v91 = vstv %s90
    %v92 = vmul.f32 %v89, %v91
    %v93 = vld [vmem:[%s43] sm:$0x3]
    %s94 = sld [smem:[#allocation2 + $0x101]]
    %v95 = vstv %s94
    %v96 = vmul.f32 %v93, %v95
    %v97 = vadd.f32 %v92, %v96
    %v98 = vld [vmem:[%s49] sm:$0x3]
    %s99 = sld [smem:[#allocation2 + $0x102]]
    %v100 = vstv %s99
    %v101 = vmul.f32 %v98, %v100
    %v102 = vadd.f32 %v97, %v101
    %v103 = vld [vmem:[%s55] sm:$0x3]
    %s104 = sld [smem:[#allocation2 + $0x103]]
    %v105 = vstv %s104
    %v106 = vmul.f32 %v103, %v105
    %v107 = vadd.f32 %v102, %v106
    %s108 = sld [smem:[#allocation4 + $0x2]]
    %v109 = vstv %s108
    %v110 = vadd.f32 %v107, %v109
    %s111 = scalar_lea.vmem %s3, 4
    %112 = vst [vmem:[%s111] sm:$0x3] %v110
    %v113 = vld [vmem:[%s2] sm:$0x3]
    %s114 = sld [smem:[#allocation2 + $0x180]]
    %v115 = vstv %s114
    %v116 = vmul.f32 %v113, %v115
    %v117 = vld [vmem:[%s43] sm:$0x3]
    %s118 = sld [smem:[#allocation2 + $0x181]]
    %v119 = vstv %s118
    %v120 = vmul.f32 %v117, %v119
    %v121 = vadd.f32 %v116, %v120
    %v122 = vld [vmem:[%s49] sm:$0x3]
    %s123 = sld [smem:[#allocation2 + $0x182]]
    %v124 = vstv %s123
    %v125 = vmul.f32 %v122, %v124
    %v126 = vadd.f32 %v121, %v125
    %v127 = vld [vmem:[%s55] sm:$0x3]
    %s128 = sld [smem:[#allocation2 + $0x183]]
    %v129 = vstv %s128
    %v130 = vmul.f32 %v127, %v129
    %v131 = vadd.f32 %v126, %v130
    %s132 = sld [smem:[#allocation4 + $0x3]]
    %v133 = vstv %s132
    %v134 = vadd.f32 %v131, %v133
    %s135 = scalar_lea.vmem %s3, 6
    %136 = vst [vmem:[%s135] sm:$0x3] %v134
    %s137 = scalar_lea.vmem %s2, 8
    %v138 = vld [vmem:[%s137] sm:$0x3]
    %s139 = sld [smem:[#allocation2]]
    %v140 = vstv %s139
    %v141 = vmul.f32 %v138, %v140
    %s142 = scalar_lea.vmem %s2, 10
    %v143 = vld [vmem:[%s142] sm:$0x3]
    %s144 = sld [smem:[#allocation2 + $0x1]]
    %v145 = vstv %s144
    %v146 = vmul.f32 %v143, %v145
    %v147 = vadd.f32 %v141, %v146
    %s148 = scalar_lea.vmem %s2, 12
    %v149 = vld [vmem:[%s148] sm:$0x3]
    %s150 = sld [smem:[#allocation2 + $0x2]]
    %v151 = vstv %s150
    %v152 = vmul.f32 %v149, %v151
    %v153 = vadd.f32 %v147, %v152
    %s154 = scalar_lea.vmem %s2, 14
    %v155 = vld [vmem:[%s154] sm:$0x3]
    %s156 = sld [smem:[#allocation2 + $0x3]]
    %v157 = vstv %s156
    %v158 = vmul.f32 %v155, %v157
    %v159 = vadd.f32 %v153, %v158
    %s160 = sld [smem:[#allocation4]]
    %v161 = vstv %s160
    %v162 = vadd.f32 %v159, %v161
    %s163 = scalar_lea.vmem %s3, 8
    %164 = vst [vmem:[%s163] sm:$0x3] %v162
    %v165 = vld [vmem:[%s137] sm:$0x3]
    %s166 = sld [smem:[#allocation2 + $0x80]]
    %v167 = vstv %s166
    %v168 = vmul.f32 %v165, %v167
    %v169 = vld [vmem:[%s142] sm:$0x3]
    %s170 = sld [smem:[#allocation2 + $0x81]]
    %v171 = vstv %s170
    %v172 = vmul.f32 %v169, %v171
    %v173 = vadd.f32 %v168, %v172
    %v174 = vld [vmem:[%s148] sm:$0x3]
    %s175 = sld [smem:[#allocation2 + $0x82]]
    %v176 = vstv %s175
    %v177 = vmul.f32 %v174, %v176
    %v178 = vadd.f32 %v173, %v177
    %v179 = vld [vmem:[%s154] sm:$0x3]
    %s180 = sld [smem:[#allocation2 + $0x83]]
    %v181 = vstv %s180
    %v182 = vmul.f32 %v179, %v181
    %v183 = vadd.f32 %v178, %v182
    %s184 = sld [smem:[#allocation4 + $0x1]]
    %v185 = vstv %s184
    %v186 = vadd.f32 %v183, %v185
    %s187 = scalar_lea.vmem %s3, 10
    %188 = vst [vmem:[%s187] sm:$0x3] %v186
    %v189 = vld [vmem:[%s137] sm:$0x3]
    %s190 = sld [smem:[#allocation2 + $0x100]]
    %v191 = vstv %s190
    %v192 = vmul.f32 %v189, %v191
    %v193 = vld [vmem:[%s142] sm:$0x3]
    %s194 = sld [smem:[#allocation2 + $0x101]]
    %v195 = vstv %s194
    %v196 = vmul.f32 %v193, %v195
    %v197 = vadd.f32 %v192, %v196
    %v198 = vld [vmem:[%s148] sm:$0x3]
    %s199 = sld [smem:[#allocation2 + $0x102]]
    %v200 = vstv %s199
    %v201 = vmul.f32 %v198, %v200
    %v202 = vadd.f32 %v197, %v201
    %v203 = vld [vmem:[%s154] sm:$0x3]
    %s204 = sld [smem:[#allocation2 + $0x103]]
    %v205 = vstv %s204
    %v206 = vmul.f32 %v203, %v205
    %v207 = vadd.f32 %v202, %v206
    %s208 = sld [smem:[#allocation4 + $0x2]]
    %v209 = vstv %s208
    %v210 = vadd.f32 %v207, %v209
    %s211 = scalar_lea.vmem %s3, 12
    %212 = vst [vmem:[%s211] sm:$0x3] %v210
    %v213 = vld [vmem:[%s137] sm:$0x3]
    %s214 = sld [smem:[#allocation2 + $0x180]]
    %v215 = vstv %s214
    %v216 = vmul.f32 %v213, %v215
    %v217 = vld [vmem:[%s142] sm:$0x3]
    %s218 = sld [smem:[#allocation2 + $0x181]]
    %v219 = vstv %s218
    %v220 = vmul.f32 %v217, %v219
    %v221 = vadd.f32 %v216, %v220
    %v222 = vld [vmem:[%s148] sm:$0x3]
    %s223 = sld [smem:[#allocation2 + $0x182]]
    %v224 = vstv %s223
    %v225 = vmul.f32 %v222, %v224
    %v226 = vadd.f32 %v221, %v225
    %v227 = vld [vmem:[%s154] sm:$0x3]
    %s228 = sld [smem:[#allocation2 + $0x183]]
    %v229 = vstv %s228
    %v230 = vmul.f32 %v227, %v229
    %v231 = vadd.f32 %v226, %v230
    %s232 = sld [smem:[#allocation4 + $0x3]]
    %v233 = vstv %s232
    %v234 = vadd.f32 %v231, %v233
    %s235 = scalar_lea.vmem %s3, 14
    %236 = vst [vmem:[%s235] sm:$0x3] %v234
    // Predicated region
    $region22: #{additive_residual.1} parent=1 // pred_check
      _
    $region23: #{additive_residual.1} parent=1 // pred_check_branch
      %238 = sbr.rel (0) target = $region25
    $region24: #{additive_residual.1} parent=1 // pred_region
      _
    $region25: #{additive_residual.1} parent=1 // pred_fallthru
      _
    // Predicated region
    $region26: #{additive_residual.1} parent=1 // pred_check
      _
    $region27: #{additive_residual.1} parent=1 // pred_check_branch
      %240 = sbr.rel (0) target = $region29
    $region28: #{additive_residual.1} parent=1 // pred_region
      _
    $region29: #{additive_residual.1} parent=1 // pred_fallthru
      _
    %241 = vsyncpa [#allocation3], 1
    %242 = vsyncpa [#allocation5], 1

</llo_original>
